<compile_context>
chip_gen: v7x
topology: tpu7x:2x2x1
jax: 0.10.0
libtpu: 0.0.40
codegen_flags: <defaults>
</compile_context>

<pallas_src>
import functools

import jax
import jax.numpy as jnp
import numpy as np
from jax import lax
from jax.experimental import pallas as pl
from jax.experimental.pallas import tpu as pltpu


def _contraclm_tok_kernel(mask_ref, h1_ref, h2_ref, loss_ref, *, temperature):
    # mask_ref: (1, S, 1) float32 token-validity mask
    # h1_ref/h2_ref: (1, S, D) hidden states of the two dropout views
    # loss_ref: (1, 1, 1) per-sequence contrastive loss
    m = mask_ref[0]                             # (S, 1) float32
    h1 = h1_ref[0]                              # (S, D) input dtype
    h2 = h2_ref[0]
    s = h1.shape[0]
    mm_dtype = h1.dtype                         # bf16 inputs -> bf16 MXU feeds

    inv_t = jnp.float32(1.0 / temperature)
    sqrt_inv_t = jnp.float32(float(np.sqrt(1.0 / temperature)))

    # F.normalize(x, dim=1) == x * rsqrt(max(sum(x^2), eps^2)); fold the
    # 1/sqrt(T) scale into the same per-row multiply.
    x1 = h1.astype(jnp.float32)
    x2 = h2.astype(jnp.float32)
    eps_sq = jnp.float32(1e-24)
    scale1 = lax.rsqrt(jnp.maximum(jnp.sum(x1 * x1, axis=-1, keepdims=True),
                                   eps_sq)) * sqrt_inv_t
    scale2 = lax.rsqrt(jnp.maximum(jnp.sum(x2 * x2, axis=-1, keepdims=True),
                                   eps_sq)) * sqrt_inv_t
    g1 = (x1 * scale1).astype(mm_dtype)         # (S, D), already / sqrt(T)
    g2 = (x2 * scale2).astype(mm_dtype)
    g1f = g1.astype(jnp.float32)
    g2f = g2.astype(jnp.float32)

    # Three S×S similarity matmuls; sim21 == sim12^T is never materialized.
    trans_b = (((1,), (1,)), ((), ()))
    s11 = lax.dot_general(g1, g1, trans_b, preferred_element_type=jnp.float32)
    s12 = lax.dot_general(g1, g2, trans_b, preferred_element_type=jnp.float32)
    s22 = lax.dot_general(g2, g2, trans_b, preferred_element_type=jnp.float32)

    e11 = jnp.exp(s11)
    e12 = jnp.exp(s12)
    e22 = jnp.exp(s22)

    # Zero the "same token" (diagonal) entries before summing.
    row_ids = lax.broadcasted_iota(jnp.int32, (s, s), 0)
    col_ids = lax.broadcasted_iota(jnp.int32, (s, s), 1)
    diag = row_ids == col_ids
    e_view1 = jnp.where(diag, 0.0, e11 + e12)   # negatives for view-1 rows
    e_view2 = jnp.where(diag, 0.0, e12 + e22)   # negatives for view-2 rows

    # Masked negative sums as (S,S)x(S,1) MXU contractions:
    #   ng1_i = sum_j m_j * e_view1[i, j]
    #   ng2_i = sum_j m_j * e_view2[j, i]   (contract over dim 0 == e21 rowsum)
    ng1 = lax.dot_general(e_view1, m, (((1,), (0,)), ((), ())),
                          preferred_element_type=jnp.float32)        # (S, 1)
    ng2 = lax.dot_general(e_view2, m, (((0,), (0,)), ((), ())),
                          preferred_element_type=jnp.float32)        # (S, 1)

    # Positive-pair logit / exp (per token, elementwise like the reference).
    pos_logit = jnp.sum(g1f * g2f, axis=-1, keepdims=True)           # (S, 1)
    pos = jnp.exp(pos_logit)

    # -log(pos / (Ng + pos)) == log(Ng + pos) - log(pos)
    l1 = jnp.log(ng1 + pos) - pos_logit
    l2 = jnp.log(ng2 + pos) - pos_logit

    num = jnp.sum(m * (l1 + l2))                # only valid rows contribute
    n_valid = jnp.sum(m)
    loss_b = num / (2.0 * jnp.maximum(n_valid, 1.0))   # mean over 2N rows

    loss_ref[...] = jnp.broadcast_to(loss_b, (1, 1, 1))


def contraclm_tok_loss(last_hidden_states_1, last_hidden_states_2,
                       token_mask_batch, *, temperature=0.05, pad_token_id=0):
    """Pallas implementation of ContraCLMTokLoss.forward."""
    del pad_token_id  # carried for API fidelity; unused in forward
    b, s, d = last_hidden_states_1.shape
    m_row = token_mask_batch.astype(jnp.float32).reshape(b, s, 1)

    kernel = functools.partial(_contraclm_tok_kernel, temperature=temperature)

    # Raise the scoped-VMEM limit when whole-sequence blocks get large
    # (clamped to 64 MiB so the request is valid on v7x as well).
    itemsize = jnp.dtype(last_hidden_states_1.dtype).itemsize
    est = (2 * (2 * s * d * itemsize + 4 * s)   # double-buffered input streams
           + 4 * s * d * 4                      # f32 normalized copies
           + 6 * s * s * 4)                     # logit + exp temporaries
    vmem_limit = int(min(max(2 * est, 32 * 1024 * 1024), 64 * 1024 * 1024))

    per_seq = pl.pallas_call(
        kernel,
        out_shape=jax.ShapeDtypeStruct((b, 1, 1), jnp.float32),
        grid_spec=pltpu.PrefetchScalarGridSpec(
            num_scalar_prefetch=0,
            grid=(b,),
            in_specs=[
                pl.BlockSpec((1, s, 1), lambda i: (i, 0, 0)),
                pl.BlockSpec((1, s, d), lambda i: (i, 0, 0)),
                pl.BlockSpec((1, s, d), lambda i: (i, 0, 0)),
            ],
            out_specs=pl.BlockSpec((1, 1, 1), lambda i: (i, 0, 0)),
        ),
        compiler_params=pltpu.CompilerParams(
            dimension_semantics=("parallel",),
            vmem_limit_bytes=vmem_limit),
    )(m_row, last_hidden_states_1, last_hidden_states_2)

    # token_cl_loss / len(last_hidden_states_1)
    return jnp.mean(per_seq)


def _reference(h1, h2, mask, temperature):
    """NumPy re-implementation of the PyTorch module (dynamic shapes)."""
    h1 = np.asarray(h1, np.float32)
    h2 = np.asarray(h2, np.float32)
    mask = np.asarray(mask, bool)
    total = 0.0
    for bb in range(h1.shape[0]):
        f1 = h1[bb][mask[bb]]
        f2 = h2[bb][mask[bb]]
        n = f1.shape[0]
        f1 = f1 / np.maximum(np.linalg.norm(f1, axis=1, keepdims=True), 1e-12)
        f2 = f2 / np.maximum(np.linalg.norm(f2, axis=1, keepdims=True), 1e-12)
        feats = np.concatenate([f1, f2], axis=0)
        m = ~np.tile(np.eye(n, dtype=bool), (2, 2))
        pos = np.exp(np.sum(f1 * f2, axis=-1) / temperature)
        pos = np.concatenate([pos, pos], axis=0)
        neg = np.exp(feats @ feats.T / temperature)
        neg = neg[m].reshape(2 * n, -1)
        ng = neg.sum(axis=-1)
        total += np.mean(-np.log(pos / (ng + pos)))
    return total / h1.shape[0]


if __name__ == "__main__":
    B, S, D = 2, 16, 128
    temperature = 0.05
    pad_token_id = 0

    key = jax.random.PRNGKey(0)
    k1, k2 = jax.random.split(key)
    h1 = jax.random.normal(k1, (B, S, D), dtype=jnp.float32)
    h2 = jax.random.normal(k2, (B, S, D), dtype=jnp.float32)

    # Valid-token mask: sequence 0 has 12 valid tokens, sequence 1 has 9.
    lengths = jnp.array([12, 9], dtype=jnp.int32)
    token_mask = (jnp.arange(S)[None, :] < lengths[:, None])

    loss = contraclm_tok_loss(h1, h2, token_mask,
                              temperature=temperature,
                              pad_token_id=pad_token_id)
    loss = jax.block_until_ready(loss)

    ref = _reference(h1, h2, token_mask, temperature)
    np.testing.assert_allclose(np.asarray(loss), ref, rtol=1e-3, atol=1e-4)

    print("KERNEL_OK")
</pallas_src>

<mosaic_0001>
module attributes {stable_mosaic.version = 11 : i64} {
  func.func @_contraclm_tok_kernel(%arg0: i32, %arg1: memref<1x16x1xf32, #tpu.memory_space<vmem>>, %arg2: memref<1x16x128xf32, #tpu.memory_space<vmem>>, %arg3: memref<1x16x128xf32, #tpu.memory_space<vmem>>, %arg4: memref<1x1x1xf32, #tpu.memory_space<vmem>>) attributes {dimension_semantics = [#tpu.dimension_semantics<parallel>], iteration_bounds = array<i64: 2>, scalar_prefetch = 0 : i64, scratch_operands = 0 : i64, tpu.core_type = #tpu.core_type<tc>, window_params = [{transform_indices = @transform_0, window_bounds = array<i64: 1, 16, 1>}, {transform_indices = @transform_1, window_bounds = array<i64: 1, 16, 128>}, {transform_indices = @transform_2, window_bounds = array<i64: 1, 16, 128>}, {transform_indices = @transform_3, window_bounds = array<i64: 1, 1, 1>}]} {
    %c0 = arith.constant 0 : index
    %c0_0 = arith.constant 0 : index
    %c0_1 = arith.constant 0 : index
    %0 = vector.load %arg1[%c0, %c0_0, %c0_1] : memref<1x16x1xf32, #tpu.memory_space<vmem>>, vector<1x16x1xf32>
    %1 = vector.shape_cast %0 : vector<1x16x1xf32> to vector<16x1xf32>
    %c0_2 = arith.constant 0 : index
    %c0_3 = arith.constant 0 : index
    %c0_4 = arith.constant 0 : index
    %2 = vector.load %arg2[%c0_2, %c0_3, %c0_4] : memref<1x16x128xf32, #tpu.memory_space<vmem>>, vector<1x16x128xf32>
    %3 = vector.shape_cast %2 : vector<1x16x128xf32> to vector<16x128xf32>
    %c0_5 = arith.constant 0 : index
    %c0_6 = arith.constant 0 : index
    %c0_7 = arith.constant 0 : index
    %4 = vector.load %arg3[%c0_5, %c0_6, %c0_7] : memref<1x16x128xf32, #tpu.memory_space<vmem>>, vector<1x16x128xf32>
    %5 = vector.shape_cast %4 : vector<1x16x128xf32> to vector<16x128xf32>
    %6 = arith.mulf %3, %3 : vector<16x128xf32>
    %cst = arith.constant dense<0.000000e+00> : vector<16xf32>
    %7 = vector.multi_reduction <add>, %6, %cst [1] : vector<16x128xf32> to vector<16xf32>
    %8 = vector.shape_cast %7 : vector<16xf32> to vector<16x1xf32>
    %cst_8 = arith.constant 1.000000e-24 : f32
    %9 = vector.broadcast %cst_8 : f32 to vector<16x1xf32>
    %10 = arith.maximumf %8, %9 : vector<16x1xf32>
    %11 = math.rsqrt %10 : vector<16x1xf32>
    %cst_9 = arith.constant 4.47213602 : f32
    %12 = vector.broadcast %cst_9 : f32 to vector<16x1xf32>
    %13 = arith.mulf %11, %12 : vector<16x1xf32>
    %14 = arith.mulf %5, %5 : vector<16x128xf32>
    %cst_10 = arith.constant dense<0.000000e+00> : vector<16xf32>
    %15 = vector.multi_reduction <add>, %14, %cst_10 [1] : vector<16x128xf32> to vector<16xf32>
    %16 = vector.shape_cast %15 : vector<16xf32> to vector<16x1xf32>
    %cst_11 = arith.constant 1.000000e-24 : f32
    %17 = vector.broadcast %cst_11 : f32 to vector<16x1xf32>
    %18 = arith.maximumf %16, %17 : vector<16x1xf32>
    %19 = math.rsqrt %18 : vector<16x1xf32>
    %cst_12 = arith.constant 4.47213602 : f32
    %20 = vector.broadcast %cst_12 : f32 to vector<16x1xf32>
    %21 = arith.mulf %19, %20 : vector<16x1xf32>
    %22 = vector.broadcast %13 : vector<16x1xf32> to vector<16x128xf32>
    %23 = arith.mulf %3, %22 : vector<16x128xf32>
    %24 = vector.broadcast %21 : vector<16x1xf32> to vector<16x128xf32>
    %25 = arith.mulf %5, %24 : vector<16x128xf32>
    %cst_13 = arith.constant dense<0.000000e+00> : vector<16x16xf32>
    %26 = tpu.matmul %23, %23, %cst_13 {dimension_numbers = #tpu.dot_dimension_numbers<[1], [1], [0], [0], [0, 0, 1, 0], [], []>} : vector<16x128xf32>, vector<16x128xf32>, vector<16x16xf32> -> vector<16x16xf32>
    %cst_14 = arith.constant dense<0.000000e+00> : vector<16x16xf32>
    %27 = tpu.matmul %23, %25, %cst_14 {dimension_numbers = #tpu.dot_dimension_numbers<[1], [1], [0], [0], [0, 0, 1, 0], [], []>} : vector<16x128xf32>, vector<16x128xf32>, vector<16x16xf32> -> vector<16x16xf32>
    %cst_15 = arith.constant dense<0.000000e+00> : vector<16x16xf32>
    %28 = tpu.matmul %25, %25, %cst_15 {dimension_numbers = #tpu.dot_dimension_numbers<[1], [1], [0], [0], [0, 0, 1, 0], [], []>} : vector<16x128xf32>, vector<16x128xf32>, vector<16x16xf32> -> vector<16x16xf32>
    %29 = math.exp %26 : vector<16x16xf32>
    %30 = math.exp %27 : vector<16x16xf32>
    %31 = math.exp %28 : vector<16x16xf32>
    %32 = tpu.iota {dimensions = array<i32: 0>} : vector<16x16xi32>
    %33 = tpu.iota {dimensions = array<i32: 1>} : vector<16x16xi32>
    %34 = arith.cmpi eq, %32, %33 : vector<16x16xi32>
    %35 = arith.addf %29, %30 : vector<16x16xf32>
    %cst_16 = arith.constant 0.000000e+00 : f32
    %36 = vector.broadcast %cst_16 : f32 to vector<16x16xf32>
    %37 = arith.select %34, %36, %35 : vector<16x16xi1>, vector<16x16xf32>
    %38 = arith.addf %30, %31 : vector<16x16xf32>
    %cst_17 = arith.constant 0.000000e+00 : f32
    %39 = vector.broadcast %cst_17 : f32 to vector<16x16xf32>
    %40 = arith.select %34, %39, %38 : vector<16x16xi1>, vector<16x16xf32>
    %cst_18 = arith.constant dense<0.000000e+00> : vector<16x1xf32>
    %41 = tpu.matmul %37, %1, %cst_18 {dimension_numbers = #tpu.dot_dimension_numbers<[1], [0], [0], [1], [0, 0, 1, 1], [], []>} : vector<16x16xf32>, vector<16x1xf32>, vector<16x1xf32> -> vector<16x1xf32>
    %cst_19 = arith.constant dense<0.000000e+00> : vector<16x1xf32>
    %42 = tpu.matmul %40, %1, %cst_19 {dimension_numbers = #tpu.dot_dimension_numbers<[0], [0], [1], [1], [0, 1, 1, 1], [], []>} : vector<16x16xf32>, vector<16x1xf32>, vector<16x1xf32> -> vector<16x1xf32>
    %43 = arith.mulf %23, %25 : vector<16x128xf32>
    %cst_20 = arith.constant dense<0.000000e+00> : vector<16xf32>
    %44 = vector.multi_reduction <add>, %43, %cst_20 [1] : vector<16x128xf32> to vector<16xf32>
    %45 = vector.shape_cast %44 : vector<16xf32> to vector<16x1xf32>
    %46 = math.exp %45 : vector<16x1xf32>
    %47 = arith.addf %41, %46 : vector<16x1xf32>
    %48 = math.log %47 : vector<16x1xf32>
    %49 = arith.subf %48, %45 : vector<16x1xf32>
    %50 = arith.addf %42, %46 : vector<16x1xf32>
    %51 = math.log %50 : vector<16x1xf32>
    %52 = arith.subf %51, %45 : vector<16x1xf32>
    %53 = arith.addf %49, %52 : vector<16x1xf32>
    %54 = arith.mulf %1, %53 : vector<16x1xf32>
    %55 = vector.shape_cast %54 : vector<16x1xf32> to vector<1x16x1xf32>
    %cst_21 = arith.constant dense<0.000000e+00> : vector<1xf32>
    %56 = vector.multi_reduction <add>, %55, %cst_21 [1, 2] : vector<1x16x1xf32> to vector<1xf32>
    %57 = vector.shape_cast %56 : vector<1xf32> to vector<1x1x1xf32>
    %58 = vector.extract %57[0, 0, 0] : f32 from vector<1x1x1xf32>
    %59 = vector.shape_cast %1 : vector<16x1xf32> to vector<1x16x1xf32>
    %cst_22 = arith.constant dense<0.000000e+00> : vector<1xf32>
    %60 = vector.multi_reduction <add>, %59, %cst_22 [1, 2] : vector<1x16x1xf32> to vector<1xf32>
    %61 = vector.shape_cast %60 : vector<1xf32> to vector<1x1x1xf32>
    %62 = vector.extract %61[0, 0, 0] : f32 from vector<1x1x1xf32>
    %cst_23 = arith.constant 1.000000e+00 : f32
    %63 = arith.maximumf %62, %cst_23 : f32
    %cst_24 = arith.constant 2.000000e+00 : f32
    %64 = arith.mulf %cst_24, %63 : f32
    %65 = arith.divf %58, %64 : f32
    %66 = vector.broadcast %65 : f32 to vector<1x1x1xf32>
    %c0_25 = arith.constant 0 : index
    %c0_26 = arith.constant 0 : index
    %c0_27 = arith.constant 0 : index
    %67 = vector.load %arg4[%c0_25, %c0_26, %c0_27] : memref<1x1x1xf32, #tpu.memory_space<vmem>>, vector<1x1x1xf32>
    tpu.vector_store %arg4[%c0_25, %c0_26, %c0_27], %66 {strides = array<i32>} : memref<1x1x1xf32, #tpu.memory_space<vmem>>, vector<1x1x1xf32>,
    return
  }
  func.func @transform_0(%arg0: i32) -> (i32, i32, i32) {
    %c0_i32 = arith.constant 0 : i32
    %c0_i32_0 = arith.constant 0 : i32
    %c0_i32_1 = arith.constant 0 : i32
    return %arg0, %c0_i32, %c0_i32_0 : i32, i32, i32
  }
  func.func @transform_1(%arg0: i32) -> (i32, i32, i32) {
    %c0_i32 = arith.constant 0 : i32
    %c0_i32_0 = arith.constant 0 : i32
    %c0_i32_1 = arith.constant 0 : i32
    return %arg0, %c0_i32, %c0_i32_0 : i32, i32, i32
  }
  func.func @transform_2(%arg0: i32) -> (i32, i32, i32) {
    %c0_i32 = arith.constant 0 : i32
    %c0_i32_0 = arith.constant 0 : i32
    %c0_i32_1 = arith.constant 0 : i32
    return %arg0, %c0_i32, %c0_i32_0 : i32, i32, i32
  }
  func.func @transform_3(%arg0: i32) -> (i32, i32, i32) {
    %c0_i32 = arith.constant 0 : i32
    %c0_i32_0 = arith.constant 0 : i32
    %c0_i32_1 = arith.constant 0 : i32
    return %arg0, %c0_i32, %c0_i32_0 : i32, i32, i32
  }
}

</mosaic_0001>

<llo_original>
// kernel: tpu_custom_call.1
$region0: #{tpu_custom_call.1}
  #allocation0 [shape = 'u32[]', space=smem, size = 0x4, offset = 0x4, fixed_abs, tag = 'smem constant byte address 0x4 - core index']
  #allocation1 [shape = 'u32[144,128]{1,0:T(1,128)}', space=vmem, size = 0x12000, scoped, tag = 'internal scratch']
  %s0 = inlined_call_operand.vmem [shape: f32[2,16,1], index: 0, kind: input, shape index: {}]
  %s1 = inlined_call_operand.vmem [shape: f32[2,16,128], index: 1, kind: input, shape index: {}]
  %s2 = inlined_call_operand.hbm [shape: f32[2,16,128], index: 2, kind: input, shape index: {}]
  %s3 = inlined_call_operand.vmem [shape: f32[2,1,1], index: 3, kind: output, shape index: {}]
  %s4 = sld [smem:[#allocation0]]
  $region49: #{tpu_custom_call.1} parent=0
    _
  %s6 = ssub.s32 1, %s4
  %s7 = scalar_select 0, %s6, %s4
  $region1: #{tpu_custom_call.1} parent=0
    #allocation2 [shape = 'u8[16384]{0}', space=vmem, size = 0x4000, scoped, tag = 'input window, operand 2']
    #allocation3 [shape = 's32[2]{0}', space=sflag, size = 0x8, scoped, tag = 'scoped memory for tpu_custom_call.1']
    %8 = vsyncpa [#allocation3], 0
    %s9 = scalar_lea.sflag [#allocation3], 1
    %10 = vsyncpa %s9, 0
    loop: start=0, step=1, limit=4
    $region2: #{tpu_custom_call.1} parent=1 // loop_pre_header
      _
    $region3: #{tpu_custom_call.1} parent=1 // loop_header
      %s12 = sphi 0, %s16
      %p13 = scmp.ge.s32.totalorder %s12, 4
      %s22 = sphi 0, %s24
      %s25 = sphi 0, %s22
      %s26 = sphi 0, %s25
      %s42 = sphi 0, %s26
      %s48 = sphi 0, %s50
      %s51 = sphi 0, %s48
      %s52 = sphi 0, %s51
      %s68 = sphi 0, %s52
      %s74 = sphi 0, %s76
      %s77 = sphi 0, %s74
      %s78 = sphi 0, %s77
      %s94 = sphi 0, %s78
      %s100 = sphi 0, %s102
      %s103 = sphi 0, %s100
      %s104 = sphi 0, %s103
      %s120 = sphi 0, %s104
    $region4: #{tpu_custom_call.1} parent=1 // loop_header_branch
      %15 = sbr.rel (%p13) target = $region8
    $region5: #{tpu_custom_call.1} parent=1 // loop_body
      %s17 = ssub.s32 %s12, 1
      %s18 = ssub.s32 %s12, 2
      %s19 = sadd.s32 %s12, 1
      %s20 = ssub.s32 %s12, %s19
      %p21 = scmp.eq.s32.totalorder %s20, 0
      %s23 = sadd.s32 %s22, 1
      %s24 = scalar_select %p21, %s22, %s23
      %p27 = pneg %p21
      %p28 = scmp.eq.s32.totalorder %s12, 1
      %p29 = por %p27, %p28
      %p30 = scmp.ne.s32.totalorder %s22, %s25
      %p31 = scmp.eq.s32.totalorder %s12, 0
      %p32 = por %p30, %p31
      %p33 = scmp.ne.s32.totalorder %s22, %s25
      %p34 = scmp.eq.s32.totalorder %s17, 1
      %p35 = por %p33, %p34
      %p36 = scmp.ne.s32.totalorder %s25, %s26
      %p37 = scmp.eq.s32.totalorder %s17, 0
      %p38 = por %p36, %p37
      %p39 = scmp.ne.s32.totalorder %s25, %s26
      %p40 = scmp.eq.s32.totalorder %s18, 1
      %p41 = por %p39, %p40
      %p43 = scmp.ne.s32.totalorder %s26, %s42
      %p44 = scmp.eq.s32.totalorder %s18, 0
      %p45 = por %p43, %p44
      %s46 = ssub.s32 %s12, %s19
      %p47 = scmp.eq.s32.totalorder %s46, 0
      %s49 = sadd.s32 %s48, 1
      %s50 = scalar_select %p47, %s48, %s49
      %p53 = pneg %p47
      %p54 = scmp.eq.s32.totalorder %s12, 1
      %p55 = por %p53, %p54
      %p56 = scmp.ne.s32.totalorder %s48, %s51
      %p57 = scmp.eq.s32.totalorder %s12, 0
      %p58 = por %p56, %p57
      %p59 = scmp.ne.s32.totalorder %s48, %s51
      %p60 = scmp.eq.s32.totalorder %s17, 1
      %p61 = por %p59, %p60
      %p62 = scmp.ne.s32.totalorder %s51, %s52
      %p63 = scmp.eq.s32.totalorder %s17, 0
      %p64 = por %p62, %p63
      %p65 = scmp.ne.s32.totalorder %s51, %s52
      %p66 = scmp.eq.s32.totalorder %s18, 1
      %p67 = por %p65, %p66
      %p69 = scmp.ne.s32.totalorder %s52, %s68
      %p70 = scmp.eq.s32.totalorder %s18, 0
      %p71 = por %p69, %p70
      %s72 = ssub.s32 %s12, %s19
      %p73 = scmp.eq.s32.totalorder %s72, 0
      %s75 = sadd.s32 %s74, 1
      %s76 = scalar_select %p73, %s74, %s75
      %p79 = pneg %p73
      %p80 = scmp.eq.s32.totalorder %s12, 1
      %p81 = por %p79, %p80
      %p82 = scmp.ne.s32.totalorder %s74, %s77
      %p83 = scmp.eq.s32.totalorder %s12, 0
      %p84 = por %p82, %p83
      %p85 = scmp.ne.s32.totalorder %s74, %s77
      %p86 = scmp.eq.s32.totalorder %s17, 1
      %p87 = por %p85, %p86
      %p88 = scmp.ne.s32.totalorder %s77, %s78
      %p89 = scmp.eq.s32.totalorder %s17, 0
      %p90 = por %p88, %p89
      %p91 = scmp.ne.s32.totalorder %s77, %s78
      %p92 = scmp.eq.s32.totalorder %s18, 1
      %p93 = por %p91, %p92
      %p95 = scmp.ne.s32.totalorder %s78, %s94
      %p96 = scmp.eq.s32.totalorder %s18, 0
      %p97 = por %p95, %p96
      %s98 = ssub.s32 %s12, %s19
      %p99 = scmp.eq.s32.totalorder %s98, 0
      %s101 = sadd.s32 %s100, 1
      %s102 = scalar_select %p99, %s100, %s101
      %p105 = pneg %p99
      %p106 = scmp.eq.s32.totalorder %s12, 1
      %p107 = por %p105, %p106
      %p108 = scmp.ne.s32.totalorder %s100, %s103
      %p109 = scmp.eq.s32.totalorder %s12, 0
      %p110 = por %p108, %p109
      %p111 = scmp.ne.s32.totalorder %s100, %s103
      %p112 = scmp.eq.s32.totalorder %s17, 1
      %p113 = por %p111, %p112
      %p114 = scmp.ne.s32.totalorder %s103, %s104
      %p115 = scmp.eq.s32.totalorder %s17, 0
      %p116 = por %p114, %p115
      %p117 = scmp.ne.s32.totalorder %s103, %s104
      %p118 = scmp.eq.s32.totalorder %s18, 1
      %p119 = por %p117, %p118
      %p121 = scmp.ne.s32.totalorder %s104, %s120
      %p122 = scmp.eq.s32.totalorder %s18, 0
      %p123 = por %p121, %p122
      %p124 = scmp.le.s32.totalorder 1, %s12
      %p125 = scmp.lt.s32.totalorder %s12, 3
      %p126 = pnand %p124, %p125
      %p127 = pneg %p126
      // Predicated region
      $region9: #{tpu_custom_call.1} parent=5 // pred_check
        _
      $region10: #{tpu_custom_call.1} parent=5 // pred_check_branch
        %129 = sbr.rel (%p126) target = $region12
      $region11: #{tpu_custom_call.1} parent=5 // pred_region
        %s130 = ssub.s32 %s12, 1
      $region12: #{tpu_custom_call.1} parent=5 // pred_fallthru
        _
      %p131 = scmp.lt.s32.totalorder %s12, 2
      // Predicated region
      $region13: #{tpu_custom_call.1} parent=5 // pred_check
        %p132 = pneg %p131
      $region14: #{tpu_custom_call.1} parent=5 // pred_check_branch
        %134 = sbr.rel (%p132) target = $region16
      $region15: #{tpu_custom_call.1} parent=5 // pred_region
        // Predicated region
        $region17: #{tpu_custom_call.1} parent=15 // pred_check
          %p135 = pneg %p32
        $region18: #{tpu_custom_call.1} parent=15 // pred_check_branch
          %137 = sbr.rel (%p135) target = $region20
        $region19: #{tpu_custom_call.1} parent=15 // pred_region
          %p138 = scmp.lt.s32.totalorder %s12, 1
          %s139 = scalar_select %p138, %s12, 1
          %s140 = smul.addr %s139, 2
          %s141 = smul.addr %s140, 8
          %s142 = scalar_lea.vmem %s0, %s141
        $region20: #{tpu_custom_call.1} parent=15 // pred_fallthru
          _
        // Predicated region
        $region21: #{tpu_custom_call.1} parent=15 // pred_check
          %p143 = pneg %p58
        $region22: #{tpu_custom_call.1} parent=15 // pred_check_branch
          %145 = sbr.rel (%p143) target = $region24
        $region23: #{tpu_custom_call.1} parent=15 // pred_region
          %p146 = scmp.lt.s32.totalorder %s12, 1
          %s147 = scalar_select %p146, %s12, 1
          %s148 = smul.addr %s147, 2
          %s149 = smul.addr %s148, 8
          %s150 = scalar_lea.vmem %s1, %s149
        $region24: #{tpu_custom_call.1} parent=15 // pred_fallthru
          _
        // Predicated region
        $region25: #{tpu_custom_call.1} parent=15 // pred_check
          %p151 = pneg %p84
        $region26: #{tpu_custom_call.1} parent=15 // pred_check_branch
          %153 = sbr.rel (%p151) target = $region28
        $region27: #{tpu_custom_call.1} parent=15 // pred_region
          %s154 = sand.u32 %s74, 1
          %s155 = scalar_lea.sflag [#allocation3], %s154
          %s156 = sand.u32 %s74, 1
          %s157 = smul.addr %s156, 16
          %s158 = scalar_lea.vmem [#allocation2], %s157
          %s160 = ssub.s32 256, 256
          %161 = vsyncadd %s155, %s160
          %s162 = smul.addr %s12, 2
          %s163 = smul.addr %s162, 128
          %s164 = scalar_lea.hbm %s2, %s163
          %s165 = sshll.u32 %s158, 4
          %s166 = int_to_ptr.vmem [resolvable:$true] %s165
          %171 = dma.hbm_to_vmem [thread:$0]  %s164, 256, %s166, %s155, 128, 128, 8
        $region28: #{tpu_custom_call.1} parent=15 // pred_fallthru
          _
      $region16: #{tpu_custom_call.1} parent=5 // pred_fallthru
        _
      %p172 = scmp.le.s32.totalorder 1, %s12
      %p173 = scmp.lt.s32.totalorder %s12, 3
      %p174 = pnand %p172, %p173
      %p175 = pneg %p174
      // Predicated region
      $region29: #{tpu_custom_call.1} parent=5 // pred_check
        _
      $region30: #{tpu_custom_call.1} parent=5 // pred_check_branch
        %177 = sbr.rel (%p174) target = $region32
      $region31: #{tpu_custom_call.1} parent=5 // pred_region
        %s178 = ssub.s32 %s12, 1
        %s179 = sand.u32 %s77, 1
        %s180 = scalar_lea.sflag [#allocation3], %s179
        %s181 = sand.u32 %s77, 1
        %s182 = smul.addr %s181, 16
        %s183 = scalar_lea.vmem [#allocation2], %s182
        // Predicated region
        $region33: #{tpu_custom_call.1} parent=31 // pred_check
          %p184 = pneg %p90
        $region34: #{tpu_custom_call.1} parent=31 // pred_check_branch
          %186 = sbr.rel (%p184) target = $region36
        $region35: #{tpu_custom_call.1} parent=31 // pred_region
          %187 = dma.done %s180, 256
        $region36: #{tpu_custom_call.1} parent=31 // pred_fallthru
          _
        %p188 = scmp.lt.s32.totalorder %s17, 1
        %s189 = scalar_select %p188, %s17, 1
        %s190 = smul.addr %s189, 2
        %s191 = smul.addr %s190, 8
        %s192 = scalar_lea.vmem %s0, %s191
        %p193 = pneg %p38
        %p194 = pneg %p35
        %p195 = scmp.lt.s32.totalorder %s17, 1
        %s196 = scalar_select %p195, %s17, 1
        %s197 = smul.addr %s196, 2
        %s198 = smul.addr %s197, 8
        %s199 = scalar_lea.vmem %s1, %s198
        %p200 = pneg %p64
        %p201 = pneg %p61
        %s202 = sand.u32 %s77, 1
        %s203 = scalar_lea.sflag [#allocation3], %s202
        %s204 = sand.u32 %s77, 1
        %s205 = smul.addr %s204, 16
        %s206 = scalar_lea.vmem [#allocation2], %s205
        %p207 = pneg %p90
        %p208 = pneg %p87
        %p209 = pneg %p116
        %p210 = pneg %p113
        %p211 = scmp.lt.s32.totalorder %s17, 1
        %s212 = scalar_select %p211, %s17, 1
        %s213 = scalar_lea.vmem %s3, %s212
        %p214 = scmp.lt.s32.totalorder %s17, 1
        %s215 = scalar_select %p214, %s17, 1
        %s216 = smul.addr %s215, 2
        %s217 = smul.addr %s216, 8
        %s218 = scalar_lea.vmem %s0, %s217
        %p219 = scmp.lt.s32.totalorder %s17, 1
        %s220 = scalar_select %p219, %s17, 1
        %s221 = smul.addr %s220, 2
        %s222 = smul.addr %s221, 8
        %s223 = scalar_lea.vmem %s1, %s222
        %p224 = scmp.lt.s32.totalorder %s17, 1
        %s225 = scalar_select %p224, %s17, 1
        %s226 = scalar_lea.vmem %s3, %s225
        %v227 = vld [vmem:[%s218] sm:$0xff]
        %v228 = vld [vmem:[%s218 + $0x8] sm:$0xff]
        %v229 = vld [vmem:[%s223] sm:$0xff]
        %v230 = vld [vmem:[%s223 + $0x8] sm:$0xff]
        %v231 = vld [vmem:[%s183] sm:$0xff]
        %v232 = vld [vmem:[%s183 + $0x8] sm:$0xff]
        %v233 = vmul.f32 %v229, %v229
        %v234 = vmul.f32 %v230, %v230
        %235 = vadd.xlane.f32.xlu0 %v233
        %v236 = vpop.xlane.xlu0 %235
        %237 = vadd.xlane.f32.xlu0 %v234
        %v238 = vpop.xlane.xlu0 %237
        %v239 = vmax.f32 %v236, 1e-24
        %v240 = vmax.f32 %v238, 1e-24
        %v241 = vrsqrt.pop %v239
        %v242 = vrsqrt.pop %v240
        %v243 = vmul.f32 %v241, 4.472136
        %v244 = vmul.f32 %v242, 4.472136
        %v245 = vmul.f32 %v231, %v231
        %v246 = vmul.f32 %v232, %v232
        %247 = vadd.xlane.f32.xlu0 %v245
        %v248 = vpop.xlane.xlu0 %247
        %249 = vadd.xlane.f32.xlu0 %v246
        %v250 = vpop.xlane.xlu0 %249
        %v251 = vmax.f32 %v248, 1e-24
        %v252 = vmax.f32 %v250, 1e-24
        %v253 = vrsqrt.pop %v251
        %v254 = vrsqrt.pop %v252
        %v255 = vmul.f32 %v253, 4.472136
        %v256 = vmul.f32 %v254, 4.472136
        %v257 = vmul.f32 %v229, %v243
        %v258 = vmul.f32 %v230, %v244
        %v259 = vmul.f32 %v231, %v255
        %v260 = vmul.f32 %v232, %v256
        %261 = vmatprep.subr.mxu0 0.0
        %262 = vmatpush1.xpose.msra.mxu0 %v257
        %263 = vmatprep.subr.mxu0 0.0
        %264 = vmatpush1.xpose.msra.mxu0 %v258
        %265 = vmatprep.subr.mxu0 0.0
        %266 = vmatpush1.xpose.msra.mxu0 0.0
        %267 = vmatprep.subr.mxu0 0.0
        %268 = vmatpush1.xpose.msra.mxu0 0.0
        %269 = vmatprep.subr.mxu0 0.0
        %270 = vmatpush1.xpose.msra.mxu0 0.0
        %271 = vmatprep.subr.mxu0 0.0
        %272 = vmatpush1.xpose.msra.mxu0 0.0
        %273 = vmatprep.subr.mxu0 0.0
        %274 = vmatpush1.xpose.msra.mxu0 0.0
        %275 = vmatprep.subr.mxu0 0.0
        %276 = vmatpush1.xpose.msra.mxu0 0.0
        %277 = vmatprep.subr.mxu0 0.0
        %278 = vmatpush1.xpose.msra.mxu0 0.0
        %279 = vmatprep.subr.mxu0 0.0
        %280 = vmatpush1.xpose.msra.mxu0 0.0
        %281 = vmatprep.subr.mxu0 0.0
        %282 = vmatpush1.xpose.msra.mxu0 0.0
        %283 = vmatprep.subr.mxu0 0.0
        %284 = vmatpush1.xpose.msra.mxu0 0.0
        %285 = vmatprep.subr.mxu0 0.0
        %286 = vmatpush1.xpose.msra.mxu0 0.0
        %287 = vmatprep.subr.mxu0 0.0
        %288 = vmatpush1.xpose.msra.mxu0 0.0
        %289 = vmatprep.subr.mxu0 0.0
        %290 = vmatpush1.xpose.msra.mxu0 0.0
        %291 = vmatprep.subr.mxu0 0.0
        %292 = vmatpush1.xpose.msra.mxu0 0.0
        %293 = vmatprep.subr.mxu0 0.0
        %294 = vmatpush1.xpose.msra.mxu0 0.0
        %295 = vmatprep.subr.mxu0 0.0
        %296 = vmatpush1.xpose.msra.mxu0 0.0
        %297 = vmatprep.subr.mxu0 0.0
        %298 = vmatpush1.xpose.msra.mxu0 0.0
        %299 = vmatprep.subr.mxu0 0.0
        %300 = vmatpush1.xpose.msra.mxu0 0.0
        %301 = vmatprep.subr.mxu0 0.0
        %302 = vmatpush1.xpose.msra.mxu0 0.0
        %303 = vmatprep.subr.mxu0 0.0
        %304 = vmatpush1.xpose.msra.mxu0 0.0
        %305 = vmatprep.subr.mxu0 0.0
        %306 = vmatpush1.xpose.msra.mxu0 0.0
        %307 = vmatprep.subr.mxu0 0.0
        %308 = vmatpush1.xpose.msra.mxu0 0.0
        %309 = vmatprep.subr.mxu0 0.0
        %310 = vmatpush1.xpose.msra.mxu0 0.0
        %311 = vmatprep.subr.mxu0 0.0
        %312 = vmatpush1.xpose.msra.mxu0 0.0
        %313 = vmatprep.subr.mxu0 0.0
        %314 = vmatpush1.xpose.msra.mxu0 0.0
        %315 = vmatprep.subr.mxu0 0.0
        %316 = vmatpush1.xpose.msra.mxu0 0.0
        %317 = vmatprep.subr.mxu0 0.0
        %318 = vmatpush1.xpose.msra.mxu0 0.0
        %319 = vmatprep.subr.mxu0 0.0
        %320 = vmatpush1.xpose.msra.mxu0 0.0
        %321 = vmatprep.subr.mxu0 0.0
        %322 = vmatpush1.xpose.msra.mxu0 0.0
        %323 = vmatprep.subr.mxu0 0.0
        %324 = vmatpush1.xpose.msra.mxu0 0.0
        %325 = vmatprep.mubr.f32.mxu0 0.0
        %326 = vmatmul.mubr.f32.gmra.mrb[0].mxu0 %v257
        %v327 = vpop.f32.mrb[0].mxu0
        %v328 = vadd.f32 0.0, %v327
        %v329 = vpop.f32.mrb[0].mxu0
        %330 = vmatprep.mubr.f32.mxu0 0.0
        %331 = vmatmul.mubr.f32.gmra.mrb[0].mxu0 %v258
        %v332 = vpop.f32.mrb[0].mxu0
        %v333 = vadd.f32 0.0, %v332
        %v334 = vpop.f32.mrb[0].mxu0
        %335 = vdwg.mxu0
        %336 = vmatprep.subr.mxu0 0.0
        %337 = vmatpush1.xpose.msra.mxu0 %v259
        %338 = vmatprep.subr.mxu0 0.0
        %339 = vmatpush1.xpose.msra.mxu0 %v260
        %340 = vmatprep.subr.mxu0 0.0
        %341 = vmatpush1.xpose.msra.mxu0 0.0
        %342 = vmatprep.subr.mxu0 0.0
        %343 = vmatpush1.xpose.msra.mxu0 0.0
        %344 = vmatprep.subr.mxu0 0.0
        %345 = vmatpush1.xpose.msra.mxu0 0.0
        %346 = vmatprep.subr.mxu0 0.0
        %347 = vmatpush1.xpose.msra.mxu0 0.0
        %348 = vmatprep.subr.mxu0 0.0
        %349 = vmatpush1.xpose.msra.mxu0 0.0
        %350 = vmatprep.subr.mxu0 0.0
        %351 = vmatpush1.xpose.msra.mxu0 0.0
        %352 = vmatprep.subr.mxu0 0.0
        %353 = vmatpush1.xpose.msra.mxu0 0.0
        %354 = vmatprep.subr.mxu0 0.0
        %355 = vmatpush1.xpose.msra.mxu0 0.0
        %356 = vmatprep.subr.mxu0 0.0
        %357 = vmatpush1.xpose.msra.mxu0 0.0
        %358 = vmatprep.subr.mxu0 0.0
        %359 = vmatpush1.xpose.msra.mxu0 0.0
        %360 = vmatprep.subr.mxu0 0.0
        %361 = vmatpush1.xpose.msra.mxu0 0.0
        %362 = vmatprep.subr.mxu0 0.0
        %363 = vmatpush1.xpose.msra.mxu0 0.0
        %364 = vmatprep.subr.mxu0 0.0
        %365 = vmatpush1.xpose.msra.mxu0 0.0
        %366 = vmatprep.subr.mxu0 0.0
        %367 = vmatpush1.xpose.msra.mxu0 0.0
        %368 = vmatprep.subr.mxu0 0.0
        %369 = vmatpush1.xpose.msra.mxu0 0.0
        %370 = vmatprep.subr.mxu0 0.0
        %371 = vmatpush1.xpose.msra.mxu0 0.0
        %372 = vmatprep.subr.mxu0 0.0
        %373 = vmatpush1.xpose.msra.mxu0 0.0
        %374 = vmatprep.subr.mxu0 0.0
        %375 = vmatpush1.xpose.msra.mxu0 0.0
        %376 = vmatprep.subr.mxu0 0.0
        %377 = vmatpush1.xpose.msra.mxu0 0.0
        %378 = vmatprep.subr.mxu0 0.0
        %379 = vmatpush1.xpose.msra.mxu0 0.0
        %380 = vmatprep.subr.mxu0 0.0
        %381 = vmatpush1.xpose.msra.mxu0 0.0
        %382 = vmatprep.subr.mxu0 0.0
        %383 = vmatpush1.xpose.msra.mxu0 0.0
        %384 = vmatprep.subr.mxu0 0.0
        %385 = vmatpush1.xpose.msra.mxu0 0.0
        %386 = vmatprep.subr.mxu0 0.0
        %387 = vmatpush1.xpose.msra.mxu0 0.0
        %388 = vmatprep.subr.mxu0 0.0
        %389 = vmatpush1.xpose.msra.mxu0 0.0
        %390 = vmatprep.subr.mxu0 0.0
        %391 = vmatpush1.xpose.msra.mxu0 0.0
        %392 = vmatprep.subr.mxu0 0.0
        %393 = vmatpush1.xpose.msra.mxu0 0.0
        %394 = vmatprep.subr.mxu0 0.0
        %395 = vmatpush1.xpose.msra.mxu0 0.0
        %396 = vmatprep.subr.mxu0 0.0
        %397 = vmatpush1.xpose.msra.mxu0 0.0
        %398 = vmatprep.subr.mxu0 0.0
        %399 = vmatpush1.xpose.msra.mxu0 0.0
        %400 = vmatprep.mubr.f32.mxu0 0.0
        %401 = vmatmul.mubr.f32.gmra.mrb[0].mxu0 %v257
        %v402 = vpop.f32.mrb[0].mxu0
        %v403 = vadd.f32 0.0, %v402
        %v404 = vpop.f32.mrb[0].mxu0
        %405 = vmatprep.mubr.f32.mxu0 0.0
        %406 = vmatmul.mubr.f32.gmra.mrb[0].mxu0 %v258
        %v407 = vpop.f32.mrb[0].mxu0
        %v408 = vadd.f32 0.0, %v407
        %v409 = vpop.f32.mrb[0].mxu0
        %410 = vdwg.mxu0
        %411 = vmatprep.subr.mxu0 0.0
        %412 = vmatpush1.xpose.msra.mxu0 %v259
        %413 = vmatprep.subr.mxu0 0.0
        %414 = vmatpush1.xpose.msra.mxu0 %v260
        %415 = vmatprep.subr.mxu0 0.0
        %416 = vmatpush1.xpose.msra.mxu0 0.0
        %417 = vmatprep.subr.mxu0 0.0
        %418 = vmatpush1.xpose.msra.mxu0 0.0
        %419 = vmatprep.subr.mxu0 0.0
        %420 = vmatpush1.xpose.msra.mxu0 0.0
        %421 = vmatprep.subr.mxu0 0.0
        %422 = vmatpush1.xpose.msra.mxu0 0.0
        %423 = vmatprep.subr.mxu0 0.0
        %424 = vmatpush1.xpose.msra.mxu0 0.0
        %425 = vmatprep.subr.mxu0 0.0
        %426 = vmatpush1.xpose.msra.mxu0 0.0
        %427 = vmatprep.subr.mxu0 0.0
        %428 = vmatpush1.xpose.msra.mxu0 0.0
        %429 = vmatprep.subr.mxu0 0.0
        %430 = vmatpush1.xpose.msra.mxu0 0.0
        %431 = vmatprep.subr.mxu0 0.0
        %432 = vmatpush1.xpose.msra.mxu0 0.0
        %433 = vmatprep.subr.mxu0 0.0
        %434 = vmatpush1.xpose.msra.mxu0 0.0
        %435 = vmatprep.subr.mxu0 0.0
        %436 = vmatpush1.xpose.msra.mxu0 0.0
        %437 = vmatprep.subr.mxu0 0.0
        %438 = vmatpush1.xpose.msra.mxu0 0.0
        %439 = vmatprep.subr.mxu0 0.0
        %440 = vmatpush1.xpose.msra.mxu0 0.0
        %441 = vmatprep.subr.mxu0 0.0
        %442 = vmatpush1.xpose.msra.mxu0 0.0
        %443 = vmatprep.subr.mxu0 0.0
        %444 = vmatpush1.xpose.msra.mxu0 0.0
        %445 = vmatprep.subr.mxu0 0.0
        %446 = vmatpush1.xpose.msra.mxu0 0.0
        %447 = vmatprep.subr.mxu0 0.0
        %448 = vmatpush1.xpose.msra.mxu0 0.0
        %449 = vmatprep.subr.mxu0 0.0
        %450 = vmatpush1.xpose.msra.mxu0 0.0
        %451 = vmatprep.subr.mxu0 0.0
        %452 = vmatpush1.xpose.msra.mxu0 0.0
        %453 = vmatprep.subr.mxu0 0.0
        %454 = vmatpush1.xpose.msra.mxu0 0.0
        %455 = vmatprep.subr.mxu0 0.0
        %456 = vmatpush1.xpose.msra.mxu0 0.0
        %457 = vmatprep.subr.mxu0 0.0
        %458 = vmatpush1.xpose.msra.mxu0 0.0
        %459 = vmatprep.subr.mxu0 0.0
        %460 = vmatpush1.xpose.msra.mxu0 0.0
        %461 = vmatprep.subr.mxu0 0.0
        %462 = vmatpush1.xpose.msra.mxu0 0.0
        %463 = vmatprep.subr.mxu0 0.0
        %464 = vmatpush1.xpose.msra.mxu0 0.0
        %465 = vmatprep.subr.mxu0 0.0
        %466 = vmatpush1.xpose.msra.mxu0 0.0
        %467 = vmatprep.subr.mxu0 0.0
        %468 = vmatpush1.xpose.msra.mxu0 0.0
        %469 = vmatprep.subr.mxu0 0.0
        %470 = vmatpush1.xpose.msra.mxu0 0.0
        %471 = vmatprep.subr.mxu0 0.0
        %472 = vmatpush1.xpose.msra.mxu0 0.0
        %473 = vmatprep.subr.mxu0 0.0
        %474 = vmatpush1.xpose.msra.mxu0 0.0
        %475 = vmatprep.mubr.f32.mxu0 0.0
        %476 = vmatmul.mubr.f32.gmra.mrb[0].mxu0 %v259
        %v477 = vpop.f32.mrb[0].mxu0
        %v478 = vadd.f32 0.0, %v477
        %v479 = vpop.f32.mrb[0].mxu0
        %480 = vmatprep.mubr.f32.mxu0 0.0
        %481 = vmatmul.mubr.f32.gmra.mrb[0].mxu0 %v260
        %v482 = vpop.f32.mrb[0].mxu0
        %v483 = vadd.f32 0.0, %v482
        %v484 = vpop.f32.mrb[0].mxu0
        %485 = vdwg.mxu0
        %v486 = vmul.f32 %v328, 1.442695
        %v487 = vpow.pop %v486
        %v488 = vmul.f32 %v333, 1.442695
        %v489 = vpow.pop %v488
        %v490 = vmul.f32 %v403, 1.442695
        %v491 = vpow.pop %v490
        %v492 = vmul.f32 %v408, 1.442695
        %v493 = vpow.pop %v492
        %v494 = vmul.f32 %v478, 1.442695
        %v495 = vpow.pop %v494
        %v496 = vmul.f32 %v483, 1.442695
        %v497 = vpow.pop %v496
        %v498 = vlaneseq
        %v499 = vshrl.u32 %v498, 7
        %v500 = vadd.s32 %v499, 8
        %v501 = vlaneseq
        %v502 = vand.u32 %v501, 127
        %vm503 = vcmp.eq.s32.totalorder %v499, %v502
        %vm504 = vcmp.eq.s32.totalorder %v500, %v502
        %v505 = vadd.f32 %v487, %v491
        %v506 = vadd.f32 %v489, %v493
        %v507 = vsel %vm503, 0.0, %v505
        %v508 = vsel %vm504, 0.0, %v506
        %v509 = vadd.f32 %v491, %v495
        %v510 = vadd.f32 %v493, %v497
        %v511 = vsel %vm503, 0.0, %v509
        %v512 = vsel %vm504, 0.0, %v510
        %v513 = vmul.f32 %v257, %v259
        %v514 = vmul.f32 %v258, %v260
        %515 = vadd.xlane.f32.xlu0 %v513
        %v516 = vpop.xlane.xlu0 %515
        %517 = vadd.xlane.f32.xlu0 %v514
        %v518 = vpop.xlane.xlu0 %517
        %v519 = vmul.f32 %v516, 1.442695
        %v520 = vpow.pop %v519
        %v521 = vmul.f32 %v518, 1.442695
        %v522 = vpow.pop %v521
        %vm523 = vcmask 130048
        %v525 = vsel %vm523, %v507, 0
        %v528 = vsel %vm523, %v508, 0
        %530 = vmatprep.subr.mxu0 0.0
        %531 = vmatpush1.msra.mxu0 %v227
        %532 = vmatprep.subr.mxu0 0.0
        %533 = vmatpush1.msra.mxu0 %v228
        %534 = vmatprep.subr.mxu0 0.0
        %535 = vmatpush1.msra.mxu0 0.0
        %536 = vmatprep.subr.mxu0 0.0
        %537 = vmatpush1.msra.mxu0 0.0
        %538 = vmatprep.subr.mxu0 0.0
        %539 = vmatpush1.msra.mxu0 0.0
        %540 = vmatprep.subr.mxu0 0.0
        %541 = vmatpush1.msra.mxu0 0.0
        %542 = vmatprep.subr.mxu0 0.0
        %543 = vmatpush1.msra.mxu0 0.0
        %544 = vmatprep.subr.mxu0 0.0
        %545 = vmatpush1.msra.mxu0 0.0
        %546 = vmatprep.subr.mxu0 0.0
        %547 = vmatpush1.msra.mxu0 0.0
        %548 = vmatprep.subr.mxu0 0.0
        %549 = vmatpush1.msra.mxu0 0.0
        %550 = vmatprep.subr.mxu0 0.0
        %551 = vmatpush1.msra.mxu0 0.0
        %552 = vmatprep.subr.mxu0 0.0
        %553 = vmatpush1.msra.mxu0 0.0
        %554 = vmatprep.subr.mxu0 0.0
        %555 = vmatpush1.msra.mxu0 0.0
        %556 = vmatprep.subr.mxu0 0.0
        %557 = vmatpush1.msra.mxu0 0.0
        %558 = vmatprep.subr.mxu0 0.0
        %559 = vmatpush1.msra.mxu0 0.0
        %560 = vmatprep.subr.mxu0 0.0
        %561 = vmatpush1.msra.mxu0 0.0
        %562 = vmatprep.subr.mxu0 0.0
        %563 = vmatpush1.msra.mxu0 0.0
        %564 = vmatprep.subr.mxu0 0.0
        %565 = vmatpush1.msra.mxu0 0.0
        %566 = vmatprep.subr.mxu0 0.0
        %567 = vmatpush1.msra.mxu0 0.0
        %568 = vmatprep.subr.mxu0 0.0
        %569 = vmatpush1.msra.mxu0 0.0
        %570 = vmatprep.subr.mxu0 0.0
        %571 = vmatpush1.msra.mxu0 0.0
        %572 = vmatprep.subr.mxu0 0.0
        %573 = vmatpush1.msra.mxu0 0.0
        %574 = vmatprep.subr.mxu0 0.0
        %575 = vmatpush1.msra.mxu0 0.0
        %576 = vmatprep.subr.mxu0 0.0
        %577 = vmatpush1.msra.mxu0 0.0
        %578 = vmatprep.subr.mxu0 0.0
        %579 = vmatpush1.msra.mxu0 0.0
        %580 = vmatprep.subr.mxu0 0.0
        %581 = vmatpush1.msra.mxu0 0.0
        %582 = vmatprep.subr.mxu0 0.0
        %583 = vmatpush1.msra.mxu0 0.0
        %584 = vmatprep.subr.mxu0 0.0
        %585 = vmatpush1.msra.mxu0 0.0
        %586 = vmatprep.subr.mxu0 0.0
        %587 = vmatpush1.msra.mxu0 0.0
        %588 = vmatprep.subr.mxu0 0.0
        %589 = vmatpush1.msra.mxu0 0.0
        %590 = vmatprep.subr.mxu0 0.0
        %591 = vmatpush1.msra.mxu0 0.0
        %592 = vmatprep.subr.mxu0 0.0
        %593 = vmatpush1.msra.mxu0 0.0
        %594 = vmatprep.mubr.f32.mxu0 0.0
        %595 = vmatmul.mubr.f32.gmra.mrb[0].mxu0 %v525
        %v596 = vpop.f32.mrb[0].mxu0
        %v597 = vadd.f32 %v520, %v596
        %v598 = vpop.f32.mrb[0].mxu0
        %599 = vmatprep.mubr.f32.mxu0 0.0
        %600 = vmatmul.mubr.f32.gmra.mrb[0].mxu0 %v528
        %v601 = vpop.f32.mrb[0].mxu0
        %v602 = vadd.f32 %v522, %v601
        %v603 = vpop.f32.mrb[0].mxu0
        %604 = vdwg.mxu0
        %v605 = vlog2.pop %v597
        %v606 = vmul.f32 %v605, 0.6931472
        %v607 = vlog2.pop %v602
        %v608 = vmul.f32 %v607, 0.6931472
        %v609 = vsub.f32 %v606, %v516
        %v610 = vsub.f32 %v608, %v518
        %611 = vxpose.xlu0.b32.start [1/16] %v511, 128
        %612 = vxpose.xlu0.b32.cont [2/16] %v512, 128
        %613 = vxpose.xlu0.b32.cont [3/16] 0.0, 128
        %614 = vxpose.xlu0.b32.cont [4/16] 0.0, 128
        %615 = vxpose.xlu0.b32.cont [5/16] 0.0, 128
        %616 = vxpose.xlu0.b32.cont [6/16] 0.0, 128
        %617 = vxpose.xlu0.b32.cont [7/16] 0.0, 128
        %618 = vxpose.xlu0.b32.cont [8/16] 0.0, 128
        %619 = vxpose.xlu0.b32.cont [9/16] 0.0, 128
        %620 = vxpose.xlu0.b32.cont [10/16] 0.0, 128
        %621 = vxpose.xlu0.b32.cont [11/16] 0.0, 128
        %622 = vxpose.xlu0.b32.cont [12/16] 0.0, 128
        %623 = vxpose.xlu0.b32.cont [13/16] 0.0, 128
        %624 = vxpose.xlu0.b32.cont [14/16] 0.0, 128
        %625 = vxpose.xlu0.b32.cont [15/16] 0.0, 128
        %626 = vxpose.xlu0.b32.end [16/16] 0.0, 128
        %v627 = vpop.trf.xlu0
        %v628 = vpop.trf.xlu0
        %v629 = vpop.trf.xlu0
        %v630 = vpop.trf.xlu0
        %v631 = vpop.trf.xlu0
        %v632 = vpop.trf.xlu0
        %v633 = vpop.trf.xlu0
        %v634 = vpop.trf.xlu0
        %v635 = vpop.trf.xlu0
        %v636 = vpop.trf.xlu0
        %v637 = vpop.trf.xlu0
        %v638 = vpop.trf.xlu0
        %v639 = vpop.trf.xlu0
        %v640 = vpop.trf.xlu0
        %v641 = vpop.trf.xlu0
        %v642 = vpop.trf.xlu0
        %v644 = vsel %vm523, %v627, 0
        %v647 = vsel %vm523, %v628, 0
        %649 = vmatprep.subr.mxu0 0.0
        %650 = vmatpush1.msra.mxu0 %v227
        %651 = vmatprep.subr.mxu0 0.0
        %652 = vmatpush1.msra.mxu0 %v228
        %653 = vmatprep.subr.mxu0 0.0
        %654 = vmatpush1.msra.mxu0 0.0
        %655 = vmatprep.subr.mxu0 0.0
        %656 = vmatpush1.msra.mxu0 0.0
        %657 = vmatprep.subr.mxu0 0.0
        %658 = vmatpush1.msra.mxu0 0.0
        %659 = vmatprep.subr.mxu0 0.0
        %660 = vmatpush1.msra.mxu0 0.0
        %661 = vmatprep.subr.mxu0 0.0
        %662 = vmatpush1.msra.mxu0 0.0
        %663 = vmatprep.subr.mxu0 0.0
        %664 = vmatpush1.msra.mxu0 0.0
        %665 = vmatprep.subr.mxu0 0.0
        %666 = vmatpush1.msra.mxu0 0.0
        %667 = vmatprep.subr.mxu0 0.0
        %668 = vmatpush1.msra.mxu0 0.0
        %669 = vmatprep.subr.mxu0 0.0
        %670 = vmatpush1.msra.mxu0 0.0
        %671 = vmatprep.subr.mxu0 0.0
        %672 = vmatpush1.msra.mxu0 0.0
        %673 = vmatprep.subr.mxu0 0.0
        %674 = vmatpush1.msra.mxu0 0.0
        %675 = vmatprep.subr.mxu0 0.0
        %676 = vmatpush1.msra.mxu0 0.0
        %677 = vmatprep.subr.mxu0 0.0
        %678 = vmatpush1.msra.mxu0 0.0
        %679 = vmatprep.subr.mxu0 0.0
        %680 = vmatpush1.msra.mxu0 0.0
        %681 = vmatprep.subr.mxu0 0.0
        %682 = vmatpush1.msra.mxu0 0.0
        %683 = vmatprep.subr.mxu0 0.0
        %684 = vmatpush1.msra.mxu0 0.0
        %685 = vmatprep.subr.mxu0 0.0
        %686 = vmatpush1.msra.mxu0 0.0
        %687 = vmatprep.subr.mxu0 0.0
        %688 = vmatpush1.msra.mxu0 0.0
        %689 = vmatprep.subr.mxu0 0.0
        %690 = vmatpush1.msra.mxu0 0.0
        %691 = vmatprep.subr.mxu0 0.0
        %692 = vmatpush1.msra.mxu0 0.0
        %693 = vmatprep.subr.mxu0 0.0
        %694 = vmatpush1.msra.mxu0 0.0
        %695 = vmatprep.subr.mxu0 0.0
        %696 = vmatpush1.msra.mxu0 0.0
        %697 = vmatprep.subr.mxu0 0.0
        %698 = vmatpush1.msra.mxu0 0.0
        %699 = vmatprep.subr.mxu0 0.0
        %700 = vmatpush1.msra.mxu0 0.0
        %701 = vmatprep.subr.mxu0 0.0
        %702 = vmatpush1.msra.mxu0 0.0
        %703 = vmatprep.subr.mxu0 0.0
        %704 = vmatpush1.msra.mxu0 0.0
        %705 = vmatprep.subr.mxu0 0.0
        %706 = vmatpush1.msra.mxu0 0.0
        %707 = vmatprep.subr.mxu0 0.0
        %708 = vmatpush1.msra.mxu0 0.0
        %709 = vmatprep.subr.mxu0 0.0
        %710 = vmatpush1.msra.mxu0 0.0
        %711 = vmatprep.subr.mxu0 0.0
        %712 = vmatpush1.msra.mxu0 0.0
        %713 = vmatprep.mubr.f32.mxu0 0.0
        %714 = vmatmul.mubr.f32.gmra.mrb[0].mxu0 %v644
        %v715 = vpop.f32.mrb[0].mxu0
        %v716 = vadd.f32 %v520, %v715
        %v717 = vpop.f32.mrb[0].mxu0
        %718 = vmatprep.mubr.f32.mxu0 0.0
        %719 = vmatmul.mubr.f32.gmra.mrb[0].mxu0 %v647
        %v720 = vpop.f32.mrb[0].mxu0
        %v721 = vadd.f32 %v522, %v720
        %v722 = vpop.f32.mrb[0].mxu0
        %723 = vdwg.mxu0
        %v724 = vlog2.pop %v716
        %v725 = vmul.f32 %v724, 0.6931472
        %v726 = vlog2.pop %v721
        %v727 = vmul.f32 %v726, 0.6931472
        %v728 = vsub.f32 %v725, %v516
        %v729 = vsub.f32 %v727, %v518
        %v730 = vadd.f32 %v609, %v728
        %v731 = vadd.f32 %v610, %v729
        %v732 = vmul.f32 %v227, %v730
        %v733 = vmul.f32 %v228, %v731
        %vm734 = vcmask 7168
        %v735 = vsel %vm734, %v732, 0.0
        %v736 = vsel %vm734, %v733, 0.0
        %v737 = vadd.f32 %v735, %v736
        %738 = vadd.xlane.f32.xlu0 %v737
        %v739 = vpop.xlane.xlu0 %738
        %v740 = vrot.slane %v739, 4
        %v741 = vadd.f32 %v739, %v740
        %v742 = vrot.slane %v741, 2
        %v743 = vadd.f32 %v741, %v742
        %v744 = vrot.slane %v743, 1
        %v745 = vadd.f32 %v743, %v744
        %s746 = vtos %v745
        %v747 = vsel %vm734, %v227, 0.0
        %v748 = vsel %vm734, %v228, 0.0
        %v749 = vadd.f32 %v747, %v748
        %750 = vadd.xlane.f32.xlu0 %v749
        %v751 = vpop.xlane.xlu0 %750
        %v752 = vrot.slane %v751, 4
        %v753 = vadd.f32 %v751, %v752
        %v754 = vrot.slane %v753, 2
        %v755 = vadd.f32 %v753, %v754
        %v756 = vrot.slane %v755, 1
        %v757 = vadd.f32 %v755, %v756
        %s758 = vtos %v757
        %s759 = smax.f32 %s758, 1.0
        %s760 = smul.f32 %s759, 2.0
        %v761 = vstv %s760
        %v762 = vrcp.pop %v761
        %s763 = vtos %v762
        %s764 = smul.f32 %s746, %s763
        %v765 = vstv %s764
        %vm766 = vcmask 0
        %767 = vst.msk [vmem:[%s226] sm:$0x1] %vm766, %v765
        %p768 = scmp.lt.s32.totalorder %s17, 1
        %s769 = scalar_select %p768, %s17, 1
        %s770 = scalar_lea.vmem %s3, %s769
        // Predicated region
        $region37: #{tpu_custom_call.1} parent=31 // pred_check
          %p771 = pneg %p113
        $region38: #{tpu_custom_call.1} parent=31 // pred_check_branch
          %773 = sbr.rel (%p771) target = $region40
        $region39: #{tpu_custom_call.1} parent=31 // pred_region
          _
        $region40: #{tpu_custom_call.1} parent=31 // pred_fallthru
          _
      $region32: #{tpu_custom_call.1} parent=5 // pred_fallthru
        _
      %p774 = scmp.le.s32.totalorder 2, %s12
      // Predicated region
      $region41: #{tpu_custom_call.1} parent=5 // pred_check
        %p775 = pneg %p774
      $region42: #{tpu_custom_call.1} parent=5 // pred_check_branch
        %777 = sbr.rel (%p775) target = $region44
      $region43: #{tpu_custom_call.1} parent=5 // pred_region
        %s778 = ssub.s32 %s12, 2
        // Predicated region
        $region45: #{tpu_custom_call.1} parent=43 // pred_check
          %p779 = pneg %p119
        $region46: #{tpu_custom_call.1} parent=43 // pred_check_branch
          %781 = sbr.rel (%p779) target = $region48
        $region47: #{tpu_custom_call.1} parent=43 // pred_region
          %p782 = scmp.lt.s32.totalorder %s18, 1
          %s783 = scalar_select %p782, %s18, 1
          %s784 = scalar_lea.vmem %s3, %s783
        $region48: #{tpu_custom_call.1} parent=43 // pred_fallthru
          _
      $region44: #{tpu_custom_call.1} parent=5 // pred_fallthru
        _
    $region6: #{tpu_custom_call.1} parent=1 // loop_footer
      %s16 = sadd.s32 1, %s12
    $region7: #{tpu_custom_call.1} parent=1 // loop_footer_branch
      %11 = sbr.rel target = $region3
    $region8: #{tpu_custom_call.1} parent=1 // loop_exit
      _
    %785 = vsyncpa [#allocation3], 1
    %s786 = scalar_lea.sflag [#allocation3], 1
    %787 = vsyncpa %s786, 1

</llo_original>
